<compile_context>
chip_gen: v7x
topology: tpu7x:2x2x1
jax: 0.10.0
libtpu: 0.0.40
codegen_flags: <defaults>
</compile_context>

<pallas_src>
import math

import numpy as np

import jax
import jax.numpy as jnp
from jax.experimental import pallas as pl
from jax.experimental.pallas import tpu as pltpu


# Sublane packing per itemsize (f32 -> 8 rows/vreg, bf16 -> 16, int8 -> 32).
_SUBLANE = {1: 32, 2: 16, 4: 8}

# Below this total size, XLA's native transpose beats a pallas_call launch.
_MIN_PALLAS_BYTES = 256 * 1024


def _target_block_bytes() -> int:
    """Generation-aware per-block byte target for this memory-bound relayout."""
    vmem = 128 * 1024 * 1024
    try:
        info = pltpu.get_tpu_info()
        vmem = int(getattr(info, "vmem_capacity_bytes", vmem))
    except Exception:  # interpret mode / unknown chip
        pass
    if vmem <= 64 * 1024 * 1024:
        # v7x-class: ~3.2 TB/s HBM but only 64 MiB VMEM -> big blocks to
        # amortise the ~0.35us/step cost while keeping ~5x-block footprint low.
        return 6 * 1024 * 1024
    # v5e / v6e: 128 MiB VMEM, 0.8-1.4 TB/s HBM.
    return 4 * 1024 * 1024


def _largest_divisor(n: int, multiple: int, upper: int):
    """Largest d with d | n, d % multiple == 0 and d <= upper (None if none)."""
    upper = min(n, upper)
    best = None
    for d in range(multiple, upper + 1, multiple):
        if n % d == 0:
            best = d
    return best


def _transpose_kernel(x_ref, o_ref):
    # x: (BN, TC, TH, W) -> o: (BN, TH, TC, W).  W stays in lanes, so this is
    # a sublane-level relayout only.
    o_ref[...] = jnp.swapaxes(x_ref[...], 1, 2)


def _transpose_lane_dense_kernel(x_ref, o_ref):
    # x: (BN, C, TH, W) -> o: (BN, TH, C*W).  Row-major identical to
    # (BN, TH, C, W) but presented lane-dense so stores are wide unmasked vst.
    bn, c, th, w = x_ref.shape
    y = jnp.swapaxes(x_ref[...], 1, 2)          # (BN, TH, C, W)
    o_ref[...] = y.reshape(bn, th, c * w)


def _choose_blocks(N, C, H, W, itemsize, target):
    """Pick (bn, tc, th) block factors. H is the (possibly padded) height."""
    sub = _SUBLANE[itemsize]

    # Channel tiling: only when even a minimal-height full-C block overflows
    # the budget.  TC % 8 == 0 keeps the output's second-minor dim legal.
    tc = C
    if C % 8 == 0 and C * W * itemsize * sub > target:
        want = max(8, target // max(W * itemsize * sub, 1))
        tc = _largest_divisor(C, 8, want) or 8
    # TODO(synk): huge C that is not a multiple of 8 cannot be channel-tiled
    # (output second-minor constraint); such blocks may overflow v7x VMEM.

    row_bytes = tc * W * itemsize  # bytes per H-row, per image, per block

    # Height tiling.
    if H % sub == 0:
        max_th = max(sub, target // max(row_bytes, 1))
        th = _largest_divisor(H, sub, max_th) or sub
    else:
        th = H  # caller guarantees a full-H block fits the budget (else pads)

    block_bytes = row_bytes * th

    # Batch folding: only when one block is a full image and still small.
    bn = 1
    if th == H and tc == C and block_bytes < target and N > 1:
        max_bn = max(1, target // max(block_bytes, 1))
        bn = max(d for d in range(1, N + 1) if N % d == 0 and d <= max_bn)

    # Keep >= 2 grid steps for non-trivial inputs so v7x's two TensorCores
    # (megacore) both get work; v5e/v6e are single-TC and unaffected.
    per_image = C * H * W * itemsize
    if per_image >= (1 << 20) and (N // bn) * (H // th) * (C // tc) < 2:
        if N > 1:
            bn = _largest_divisor(N, 1, max(1, N // 2)) or 1
        elif H % sub == 0:
            th = _largest_divisor(H, sub, max(sub, H // 2)) or th

    return bn, tc, th


def transpose_c_h(img, *, min_pallas_bytes=_MIN_PALLAS_BYTES,
                  target_block_bytes=None):
    """Swap axes -3 and -2 (...CHW -> ...HCW) via a tiled Pallas TPU kernel."""
    if img.ndim < 3:
        raise ValueError("transpose_c_h expects an array with >= 3 dims")

    lead = img.shape[:-3]
    C, H, W = img.shape[-3:]
    N = math.prod(lead) if lead else 1
    out_shape_full = (*lead, H, C, W)

    itemsize = jnp.dtype(img.dtype).itemsize
    total_bytes = N * C * H * W * itemsize

    # Tiny inputs / dtypes without native vreg tiling (e.g. 64-bit): XLA's
    # native transpose is as fast or faster and always safe.
    if total_bytes < min_pallas_bytes or itemsize not in _SUBLANE:
        return jnp.swapaxes(img, -3, -2)

    sub = _SUBLANE[itemsize]
    target = int(target_block_bytes) if target_block_bytes else _target_block_bytes()

    x = img.reshape(N, C, H, W)

    # Pad H to a sublane multiple only when tiling is actually needed (one
    # cheap extra copy beats losing all compute/DMA overlap on a huge block).
    pad_h = 0
    if H % sub != 0 and C * H * W * itemsize > target:
        pad_h = (-H) % sub
        x = jnp.pad(x, ((0, 0), (0, 0), (0, pad_h), (0, 0)))
    Hp = H + pad_h

    bn, tc, th = _choose_blocks(N, C, Hp, W, itemsize, target)
    grid = (N // bn, Hp // th, C // tc)
    n_steps = grid[0] * grid[1] * grid[2]

    block_bytes = bn * tc * th * W * itemsize  # input block == output block

    # Deeper input buffering when per-step DMAs are tiny and the grid is long
    # (hides DMA-issue latency; negligible VMEM cost on a copy-only kernel).
    in_kwargs = {}
    in_buffers = 2
    if block_bytes < (1 << 20) and n_steps > 8:
        in_kwargs["pipeline_mode"] = pl.Buffered(3)
        in_buffers = 3

    # Exact scoped-VMEM budget: pipeline buffers + a small margin.
    vmem_limit = in_buffers * block_bytes + 2 * block_bytes + (2 << 20)
    vmem_limit = max(int(vmem_limit), 16 << 20)

    compiler_params = pltpu.CompilerParams(
        dimension_semantics=("parallel", "parallel", "parallel"),
        vmem_limit_bytes=vmem_limit,
    )
    # Pure bandwidth: read + write every element once.
    cost = pl.CostEstimate(
        flops=0,
        transcendentals=0,
        bytes_accessed=2 * N * C * Hp * W * itemsize,
    )
    in_specs = [
        pl.BlockSpec((bn, tc, th, W), lambda n, h, c: (n, c, h, 0), **in_kwargs)
    ]

    lane_dense = (W < 128) and (tc == C)
    if lane_dense:
        # Output presented as (N, Hp, C*W): identical row-major memory, but the
        # last block dim is the full C*W lanes -> wide unmasked stores.
        out = pl.pallas_call(
            _transpose_lane_dense_kernel,
            out_shape=jax.ShapeDtypeStruct((N, Hp, C * W), img.dtype),
            grid=grid,
            in_specs=in_specs,
            out_specs=pl.BlockSpec((bn, th, C * W), lambda n, h, c: (n, h, 0)),
            compiler_params=compiler_params,
            cost_estimate=cost,
        )(x)
        out = out.reshape(N, Hp, C, W)
    else:
        out = pl.pallas_call(
            _transpose_kernel,
            out_shape=jax.ShapeDtypeStruct((N, Hp, C, W), img.dtype),
            grid=grid,
            in_specs=in_specs,
            out_specs=pl.BlockSpec((bn, th, tc, W), lambda n, h, c: (n, h, c, 0)),
            compiler_params=compiler_params,
            cost_estimate=cost,
        )(x)

    if pad_h:
        out = out[:, :H]
    return out.reshape(out_shape_full)


def random_transpose(img, p, rng=None):
    """Forward pass of `Transpose(p)`.

    The Bernoulli coin is drawn on the host (numpy), exactly like
    torch.rand(1).item(); the output *shape* depends on it, so the branch
    cannot live under jit, and a host draw also avoids a blocking device sync.
    """
    if rng is None:
        rng = np.random.default_rng()
    if float(rng.random()) < p:
        return transpose_c_h(img)
    return img


if __name__ == "__main__":
    key = jax.random.PRNGKey(0)
    k1, k2, k3, k4, k5 = jax.random.split(key, 5)

    # Case 1: canonical small NCHW input, forced through Pallas
    # (W=16 < 128 -> lane-dense (C*W) output path).
    x = jax.random.normal(k1, (2, 4, 16, 16), dtype=jnp.float32)
    ref_x = jnp.swapaxes(x, -3, -2)
    out = jax.block_until_ready(transpose_c_h(x, min_pallas_bytes=0))
    assert out.shape == ref_x.shape, (out.shape, ref_x.shape)
    assert jnp.array_equal(out, ref_x), "case 1 mismatch"

    # Same input via the default wrapper (tiny -> XLA bypass), same result.
    out_small = jax.block_until_ready(transpose_c_h(x))
    assert jnp.array_equal(out_small, ref_x), "bypass mismatch"

    # Case 2: larger feature map -> H tiling, multi-step grid, W >= 128.
    y = jax.random.normal(k2, (1, 8, 512, 256), dtype=jnp.float32)
    out_y = jax.block_until_ready(transpose_c_h(y))
    assert jnp.array_equal(out_y, jnp.swapaxes(y, -3, -2)), "case 2 mismatch"

    # Case 3: narrow W with batch folding -> lane-dense output packing.
    z = jax.random.normal(k3, (4, 16, 128, 64), dtype=jnp.float32)
    out_z = jax.block_until_ready(transpose_c_h(z))
    assert jnp.array_equal(out_z, jnp.swapaxes(z, -3, -2)), "case 3 mismatch"

    # Case 4: bf16 (16-row sublane packing), standard path.
    w = jax.random.normal(k4, (2, 8, 32, 128), dtype=jnp.bfloat16)
    out_w = jax.block_until_ready(transpose_c_h(w, min_pallas_bytes=0))
    assert jnp.array_equal(out_w, jnp.swapaxes(w, -3, -2)), "case 4 mismatch"

    # Case 5: channel tiling + deeper input buffering, exercised with an
    # artificially small block budget.
    v = jax.random.normal(k5, (1, 32, 64, 128), dtype=jnp.float32)
    out_v = jax.block_until_ready(
        transpose_c_h(v, min_pallas_bytes=0, target_block_bytes=64 * 1024)
    )
    assert jnp.array_equal(out_v, jnp.swapaxes(v, -3, -2)), "case 5 mismatch"

    # Case 6: H not a multiple of the sublane count (small map -> th = H path).
    u = jax.random.normal(k1, (2, 4, 20, 64), dtype=jnp.float32)
    out_u = jax.block_until_ready(transpose_c_h(u, min_pallas_bytes=0))
    assert jnp.array_equal(out_u, jnp.swapaxes(u, -3, -2)), "case 6 mismatch"

    # Module semantics: probabilistic branch with a host-side coin.
    rng = np.random.default_rng(0)
    out_p1 = jax.block_until_ready(random_transpose(x, p=1.0, rng=rng))
    assert out_p1.shape == (2, 16, 4, 16) and jnp.array_equal(out_p1, ref_x)
    out_p0 = jax.block_until_ready(random_transpose(x, p=0.0, rng=rng))
    assert out_p0.shape == x.shape and jnp.array_equal(out_p0, x)

    print("KERNEL_OK")
</pallas_src>

<mosaic_0001>
module attributes {stable_mosaic.version = 11 : i64} {
  func.func @_transpose_lane_dense_kernel(%arg0: i32, %arg1: i32, %arg2: i32, %arg3: memref<2x4x16x16xf32, #tpu.memory_space<vmem>>, %arg4: memref<2x16x64xf32, #tpu.memory_space<vmem>>) attributes {dimension_semantics = [#tpu.dimension_semantics<parallel>, #tpu.dimension_semantics<parallel>, #tpu.dimension_semantics<parallel>], iteration_bounds = array<i64: 1, 1, 1>, scalar_prefetch = 0 : i64, scratch_operands = 0 : i64, tpu.core_type = #tpu.core_type<tc>, window_params = [{transform_indices = @transform_0, window_bounds = array<i64: 2, 4, 16, 16>}, {transform_indices = @transform_1, window_bounds = array<i64: 2, 16, 64>}]} {
    %c0 = arith.constant 0 : index
    %c0_0 = arith.constant 0 : index
    %c0_1 = arith.constant 0 : index
    %c0_2 = arith.constant 0 : index
    %0 = vector.load %arg3[%c0, %c0_0, %c0_1, %c0_2] : memref<2x4x16x16xf32, #tpu.memory_space<vmem>>, vector<2x4x16x16xf32>
    %1 = tpu.transpose %0, [0, 2, 1, 3] : vector<2x4x16x16xf32> -> vector<2x16x4x16xf32>
    %2 = vector.shape_cast %1 : vector<2x16x4x16xf32> to vector<2x16x64xf32>
    %c0_3 = arith.constant 0 : index
    %c0_4 = arith.constant 0 : index
    %c0_5 = arith.constant 0 : index
    %3 = vector.load %arg4[%c0_3, %c0_4, %c0_5] : memref<2x16x64xf32, #tpu.memory_space<vmem>>, vector<2x16x64xf32>
    tpu.vector_store %arg4[%c0_3, %c0_4, %c0_5], %2 {strides = array<i32>} : memref<2x16x64xf32, #tpu.memory_space<vmem>>, vector<2x16x64xf32>,
    return
  }
  func.func @transform_0(%arg0: i32, %arg1: i32, %arg2: i32) -> (i32, i32, i32, i32) {
    %c0_i32 = arith.constant 0 : i32
    %c0_i32_0 = arith.constant 0 : i32
    return %arg0, %arg2, %arg1, %c0_i32 : i32, i32, i32, i32
  }
  func.func @transform_1(%arg0: i32, %arg1: i32, %arg2: i32) -> (i32, i32, i32) {
    %c0_i32 = arith.constant 0 : i32
    %c0_i32_0 = arith.constant 0 : i32
    return %arg0, %arg1, %c0_i32 : i32, i32, i32
  }
}

</mosaic_0001>

<llo_original>
// kernel: tpu_custom_call.1
$region0: #{tpu_custom_call.1}
  #allocation0 [shape = 'u32[]', space=smem, size = 0x4, offset = 0x4, fixed_abs, tag = 'smem constant byte address 0x4 - core index']
  #allocation1 [shape = 'u32[144,128]{1,0:T(1,128)}', space=vmem, size = 0x12000, scoped, tag = 'internal scratch']
  %s0 = inlined_call_operand.hbm [shape: f32[2,4,16,16], index: 0, kind: input, shape index: {}]
  %s1 = inlined_call_operand.hbm [shape: f32[2,16,64], index: 1, kind: output, shape index: {}]
  %s2 = sld [smem:[#allocation0]]
  $region18: #{tpu_custom_call.1} parent=0
    _
  %s4 = ssub.s32 1, %s2
  %s5 = scalar_select 0, %s4, %s2
  $region1: #{tpu_custom_call.1} parent=0
    #allocation2 [shape = 'u8[65536]{0}', space=vmem, size = 0x10000, scoped, tag = 'input window, operand 0, single buffered']
    #allocation3 [shape = 's32[1]{0}', space=sflag, size = 0x4, scoped, tag = 'scoped memory for tpu_custom_call.1']
    #allocation4 [shape = 's32[1]{0}', space=sflag, size = 0x4, scoped, tag = 'scoped memory for tpu_custom_call.1']
    #allocation5 [shape = 'u8[16384]{0}', space=vmem, size = 0x4000, scoped, tag = 'output window, operand 0, single buffered']
    %6 = vsyncpa [#allocation3], 0
    %7 = vsyncpa [#allocation4], 0
    // Predicated region
    $region2: #{tpu_custom_call.1} parent=1 // pred_check
      _
    $region3: #{tpu_custom_call.1} parent=1 // pred_check_branch
      %9 = sbr.rel (0) target = $region5
    $region4: #{tpu_custom_call.1} parent=1 // pred_region
      %s11 = ssub.s32 2048, 2048
      %12 = vsyncadd [#allocation3], %s11
      %s13 = sshll.u32 [#allocation2], 4
      %s14 = int_to_ptr.vmem [resolvable:$true] %s13
      %19 = dma.hbm_to_vmem [thread:$0]  %s0, 2048, %s14, [#allocation3], 128, 128, 8
    $region5: #{tpu_custom_call.1} parent=1 // pred_fallthru
      _
    // Predicated region
    $region6: #{tpu_custom_call.1} parent=1 // pred_check
      _
    $region7: #{tpu_custom_call.1} parent=1 // pred_check_branch
      %21 = sbr.rel (0) target = $region9
    $region8: #{tpu_custom_call.1} parent=1 // pred_region
      %22 = dma.done [#allocation3], 2048
    $region9: #{tpu_custom_call.1} parent=1 // pred_fallthru
      _
    %v23 = vld [vmem:[#allocation2] sm:$0xff]
    %v24 = vld [vmem:[#allocation2 + $0x8] sm:$0xff]
    %v25 = vld [vmem:[#allocation2 + $0x10] sm:$0xff]
    %v26 = vld [vmem:[#allocation2 + $0x18] sm:$0xff]
    %v27 = vld [vmem:[#allocation2 + $0x20] sm:$0xff]
    %v28 = vld [vmem:[#allocation2 + $0x28] sm:$0xff]
    %v29 = vld [vmem:[#allocation2 + $0x30] sm:$0xff]
    %v30 = vld [vmem:[#allocation2 + $0x38] sm:$0xff]
    %v31 = vld [vmem:[#allocation2 + $0x40] sm:$0xff]
    %v32 = vld [vmem:[#allocation2 + $0x48] sm:$0xff]
    %v33 = vld [vmem:[#allocation2 + $0x50] sm:$0xff]
    %v34 = vld [vmem:[#allocation2 + $0x58] sm:$0xff]
    %v35 = vld [vmem:[#allocation2 + $0x60] sm:$0xff]
    %v36 = vld [vmem:[#allocation2 + $0x68] sm:$0xff]
    %v37 = vld [vmem:[#allocation2 + $0x70] sm:$0xff]
    %v38 = vld [vmem:[#allocation2 + $0x78] sm:$0xff]
    %v39 = vcombine.low %v23, %v27
    %v40 = vcombine.high %v23, %v27
    %v42 = vunpack.c.l.s4 1983009808
    %v43 = vunpack.c.0.s8 %v42
    %v44 = vlaneseq
    %v45 = vshrl.u32 %v44, 7
    %v46 = vsub.s32 %v43, %v45
    %v47 = vrot.slane %v39, %v46
    %v49 = vunpack.c.l.s4 1983009808
    %v50 = vunpack.c.0.s8 %v49
    %v51 = vlaneseq
    %v52 = vshrl.u32 %v51, 7
    %v53 = vsub.s32 %v50, %v52
    %v54 = vrot.slane %v40, %v53
    %v55 = vcombine.low %v25, %v29
    %v56 = vcombine.high %v25, %v29
    %v58 = vunpack.c.l.s4 1983009808
    %v59 = vunpack.c.0.s8 %v58
    %v60 = vlaneseq
    %v61 = vshrl.u32 %v60, 7
    %v62 = vsub.s32 %v59, %v61
    %v63 = vrot.slane %v55, %v62
    %v65 = vunpack.c.l.s4 1983009808
    %v66 = vunpack.c.0.s8 %v65
    %v67 = vlaneseq
    %v68 = vshrl.u32 %v67, 7
    %v69 = vsub.s32 %v66, %v68
    %v70 = vrot.slane %v56, %v69
    %v71 = vcombine.low %v47, %v63
    %v72 = vcombine.high %v47, %v63
    %v74 = vunpack.c.l.s4 1934713408
    %v75 = vunpack.c.0.s8 %v74
    %v76 = vlaneseq
    %v77 = vshrl.u32 %v76, 7
    %v78 = vsub.s32 %v75, %v77
    %v79 = vrot.slane %v71, %v78
    %v81 = vunpack.c.l.s4 1934713408
    %v82 = vunpack.c.0.s8 %v81
    %v83 = vlaneseq
    %v84 = vshrl.u32 %v83, 7
    %v85 = vsub.s32 %v82, %v84
    %v86 = vrot.slane %v72, %v85
    %v87 = vcombine.low %v54, %v70
    %v88 = vcombine.high %v54, %v70
    %v90 = vunpack.c.l.s4 1934713408
    %v91 = vunpack.c.0.s8 %v90
    %v92 = vlaneseq
    %v93 = vshrl.u32 %v92, 7
    %v94 = vsub.s32 %v91, %v93
    %v95 = vrot.slane %v87, %v94
    %v97 = vunpack.c.l.s4 1934713408
    %v98 = vunpack.c.0.s8 %v97
    %v99 = vlaneseq
    %v100 = vshrl.u32 %v99, 7
    %v101 = vsub.s32 %v98, %v100
    %v102 = vrot.slane %v88, %v101
    %v103 = vcombine.high %v79, 0.0
    %v104 = vcombine.high %v86, 0.0
    %v105 = vcombine.high %v95, 0.0
    %v106 = vcombine.high %v102, 0.0
    %v107 = vcombine.low %v24, %v28
    %v108 = vcombine.high %v24, %v28
    %v110 = vunpack.c.l.s4 1983009808
    %v111 = vunpack.c.0.s8 %v110
    %v112 = vlaneseq
    %v113 = vshrl.u32 %v112, 7
    %v114 = vsub.s32 %v111, %v113
    %v115 = vrot.slane %v107, %v114
    %v117 = vunpack.c.l.s4 1983009808
    %v118 = vunpack.c.0.s8 %v117
    %v119 = vlaneseq
    %v120 = vshrl.u32 %v119, 7
    %v121 = vsub.s32 %v118, %v120
    %v122 = vrot.slane %v108, %v121
    %v123 = vcombine.low %v26, %v30
    %v124 = vcombine.high %v26, %v30
    %v126 = vunpack.c.l.s4 1983009808
    %v127 = vunpack.c.0.s8 %v126
    %v128 = vlaneseq
    %v129 = vshrl.u32 %v128, 7
    %v130 = vsub.s32 %v127, %v129
    %v131 = vrot.slane %v123, %v130
    %v133 = vunpack.c.l.s4 1983009808
    %v134 = vunpack.c.0.s8 %v133
    %v135 = vlaneseq
    %v136 = vshrl.u32 %v135, 7
    %v137 = vsub.s32 %v134, %v136
    %v138 = vrot.slane %v124, %v137
    %v139 = vcombine.low %v115, %v131
    %v140 = vcombine.high %v115, %v131
    %v142 = vunpack.c.l.s4 1934713408
    %v143 = vunpack.c.0.s8 %v142
    %v144 = vlaneseq
    %v145 = vshrl.u32 %v144, 7
    %v146 = vsub.s32 %v143, %v145
    %v147 = vrot.slane %v139, %v146
    %v149 = vunpack.c.l.s4 1934713408
    %v150 = vunpack.c.0.s8 %v149
    %v151 = vlaneseq
    %v152 = vshrl.u32 %v151, 7
    %v153 = vsub.s32 %v150, %v152
    %v154 = vrot.slane %v140, %v153
    %v155 = vcombine.low %v122, %v138
    %v156 = vcombine.high %v122, %v138
    %v158 = vunpack.c.l.s4 1934713408
    %v159 = vunpack.c.0.s8 %v158
    %v160 = vlaneseq
    %v161 = vshrl.u32 %v160, 7
    %v162 = vsub.s32 %v159, %v161
    %v163 = vrot.slane %v155, %v162
    %v165 = vunpack.c.l.s4 1934713408
    %v166 = vunpack.c.0.s8 %v165
    %v167 = vlaneseq
    %v168 = vshrl.u32 %v167, 7
    %v169 = vsub.s32 %v166, %v168
    %v170 = vrot.slane %v156, %v169
    %v171 = vcombine.high %v147, 0.0
    %v172 = vcombine.high %v154, 0.0
    %v173 = vcombine.high %v163, 0.0
    %v174 = vcombine.high %v170, 0.0
    %v175 = vcombine.low %v31, %v35
    %v176 = vcombine.high %v31, %v35
    %v178 = vunpack.c.l.s4 1983009808
    %v179 = vunpack.c.0.s8 %v178
    %v180 = vlaneseq
    %v181 = vshrl.u32 %v180, 7
    %v182 = vsub.s32 %v179, %v181
    %v183 = vrot.slane %v175, %v182
    %v185 = vunpack.c.l.s4 1983009808
    %v186 = vunpack.c.0.s8 %v185
    %v187 = vlaneseq
    %v188 = vshrl.u32 %v187, 7
    %v189 = vsub.s32 %v186, %v188
    %v190 = vrot.slane %v176, %v189
    %v191 = vcombine.low %v33, %v37
    %v192 = vcombine.high %v33, %v37
    %v194 = vunpack.c.l.s4 1983009808
    %v195 = vunpack.c.0.s8 %v194
    %v196 = vlaneseq
    %v197 = vshrl.u32 %v196, 7
    %v198 = vsub.s32 %v195, %v197
    %v199 = vrot.slane %v191, %v198
    %v201 = vunpack.c.l.s4 1983009808
    %v202 = vunpack.c.0.s8 %v201
    %v203 = vlaneseq
    %v204 = vshrl.u32 %v203, 7
    %v205 = vsub.s32 %v202, %v204
    %v206 = vrot.slane %v192, %v205
    %v207 = vcombine.low %v183, %v199
    %v208 = vcombine.high %v183, %v199
    %v210 = vunpack.c.l.s4 1934713408
    %v211 = vunpack.c.0.s8 %v210
    %v212 = vlaneseq
    %v213 = vshrl.u32 %v212, 7
    %v214 = vsub.s32 %v211, %v213
    %v215 = vrot.slane %v207, %v214
    %v217 = vunpack.c.l.s4 1934713408
    %v218 = vunpack.c.0.s8 %v217
    %v219 = vlaneseq
    %v220 = vshrl.u32 %v219, 7
    %v221 = vsub.s32 %v218, %v220
    %v222 = vrot.slane %v208, %v221
    %v223 = vcombine.low %v190, %v206
    %v224 = vcombine.high %v190, %v206
    %v226 = vunpack.c.l.s4 1934713408
    %v227 = vunpack.c.0.s8 %v226
    %v228 = vlaneseq
    %v229 = vshrl.u32 %v228, 7
    %v230 = vsub.s32 %v227, %v229
    %v231 = vrot.slane %v223, %v230
    %v233 = vunpack.c.l.s4 1934713408
    %v234 = vunpack.c.0.s8 %v233
    %v235 = vlaneseq
    %v236 = vshrl.u32 %v235, 7
    %v237 = vsub.s32 %v234, %v236
    %v238 = vrot.slane %v224, %v237
    %v239 = vcombine.high %v215, 0.0
    %v240 = vcombine.high %v222, 0.0
    %v241 = vcombine.high %v231, 0.0
    %v242 = vcombine.high %v238, 0.0
    %v243 = vcombine.low %v32, %v36
    %v244 = vcombine.high %v32, %v36
    %v246 = vunpack.c.l.s4 1983009808
    %v247 = vunpack.c.0.s8 %v246
    %v248 = vlaneseq
    %v249 = vshrl.u32 %v248, 7
    %v250 = vsub.s32 %v247, %v249
    %v251 = vrot.slane %v243, %v250
    %v253 = vunpack.c.l.s4 1983009808
    %v254 = vunpack.c.0.s8 %v253
    %v255 = vlaneseq
    %v256 = vshrl.u32 %v255, 7
    %v257 = vsub.s32 %v254, %v256
    %v258 = vrot.slane %v244, %v257
    %v259 = vcombine.low %v34, %v38
    %v260 = vcombine.high %v34, %v38
    %v262 = vunpack.c.l.s4 1983009808
    %v263 = vunpack.c.0.s8 %v262
    %v264 = vlaneseq
    %v265 = vshrl.u32 %v264, 7
    %v266 = vsub.s32 %v263, %v265
    %v267 = vrot.slane %v259, %v266
    %v269 = vunpack.c.l.s4 1983009808
    %v270 = vunpack.c.0.s8 %v269
    %v271 = vlaneseq
    %v272 = vshrl.u32 %v271, 7
    %v273 = vsub.s32 %v270, %v272
    %v274 = vrot.slane %v260, %v273
    %v275 = vcombine.low %v251, %v267
    %v276 = vcombine.high %v251, %v267
    %v278 = vunpack.c.l.s4 1934713408
    %v279 = vunpack.c.0.s8 %v278
    %v280 = vlaneseq
    %v281 = vshrl.u32 %v280, 7
    %v282 = vsub.s32 %v279, %v281
    %v283 = vrot.slane %v275, %v282
    %v285 = vunpack.c.l.s4 1934713408
    %v286 = vunpack.c.0.s8 %v285
    %v287 = vlaneseq
    %v288 = vshrl.u32 %v287, 7
    %v289 = vsub.s32 %v286, %v288
    %v290 = vrot.slane %v276, %v289
    %v291 = vcombine.low %v258, %v274
    %v292 = vcombine.high %v258, %v274
    %v294 = vunpack.c.l.s4 1934713408
    %v295 = vunpack.c.0.s8 %v294
    %v296 = vlaneseq
    %v297 = vshrl.u32 %v296, 7
    %v298 = vsub.s32 %v295, %v297
    %v299 = vrot.slane %v291, %v298
    %v301 = vunpack.c.l.s4 1934713408
    %v302 = vunpack.c.0.s8 %v301
    %v303 = vlaneseq
    %v304 = vshrl.u32 %v303, 7
    %v305 = vsub.s32 %v302, %v304
    %v306 = vrot.slane %v292, %v305
    %v307 = vcombine.high %v283, 0.0
    %v308 = vcombine.high %v290, 0.0
    %v309 = vcombine.high %v299, 0.0
    %v310 = vcombine.high %v306, 0.0
    %v311 = vcombine.low %v79, %v86
    %v313 = vunpack.c.l.s4 1983009808
    %v314 = vunpack.c.0.s8 %v313
    %v315 = vlaneseq
    %v316 = vshrl.u32 %v315, 7
    %v317 = vsub.s32 %v314, %v316
    %v318 = vrot.slane %v311, %v317
    %v319 = vcombine.low %v103, %v104
    %v321 = vunpack.c.l.s4 1983009808
    %v322 = vunpack.c.0.s8 %v321
    %v323 = vlaneseq
    %v324 = vshrl.u32 %v323, 7
    %v325 = vsub.s32 %v322, %v324
    %v326 = vrot.slane %v319, %v325
    %v327 = vcombine.low %v95, %v102
    %v329 = vunpack.c.l.s4 1983009808
    %v330 = vunpack.c.0.s8 %v329
    %v331 = vlaneseq
    %v332 = vshrl.u32 %v331, 7
    %v333 = vsub.s32 %v330, %v332
    %v334 = vrot.slane %v327, %v333
    %v335 = vcombine.low %v105, %v106
    %v337 = vunpack.c.l.s4 1983009808
    %v338 = vunpack.c.0.s8 %v337
    %v339 = vlaneseq
    %v340 = vshrl.u32 %v339, 7
    %v341 = vsub.s32 %v338, %v340
    %v342 = vrot.slane %v335, %v341
    %v343 = vcombine.low %v318, %v326
    %v344 = vcombine.high %v318, %v326
    %v346 = vunpack.c.l.s4 1934713408
    %v347 = vunpack.c.0.s8 %v346
    %v348 = vlaneseq
    %v349 = vshrl.u32 %v348, 7
    %v350 = vsub.s32 %v347, %v349
    %v351 = vrot.slane %v343, %v350
    %v353 = vunpack.c.l.s4 1934713408
    %v354 = vunpack.c.0.s8 %v353
    %v355 = vlaneseq
    %v356 = vshrl.u32 %v355, 7
    %v357 = vsub.s32 %v354, %v356
    %v358 = vrot.slane %v344, %v357
    %v359 = vcombine.low %v334, %v342
    %v360 = vcombine.high %v334, %v342
    %v362 = vunpack.c.l.s4 1934713408
    %v363 = vunpack.c.0.s8 %v362
    %v364 = vlaneseq
    %v365 = vshrl.u32 %v364, 7
    %v366 = vsub.s32 %v363, %v365
    %v367 = vrot.slane %v359, %v366
    %v369 = vunpack.c.l.s4 1934713408
    %v370 = vunpack.c.0.s8 %v369
    %v371 = vlaneseq
    %v372 = vshrl.u32 %v371, 7
    %v373 = vsub.s32 %v370, %v372
    %v374 = vrot.slane %v360, %v373
    %v375 = vcombine.low %v351, %v367
    %v376 = vcombine.high %v351, %v367
    %v377 = vcombine.low %v358, %v374
    %v378 = vcombine.high %v358, %v374
    %v379 = vcombine.low %v147, %v154
    %v381 = vunpack.c.l.s4 1983009808
    %v382 = vunpack.c.0.s8 %v381
    %v383 = vlaneseq
    %v384 = vshrl.u32 %v383, 7
    %v385 = vsub.s32 %v382, %v384
    %v386 = vrot.slane %v379, %v385
    %v387 = vcombine.low %v171, %v172
    %v389 = vunpack.c.l.s4 1983009808
    %v390 = vunpack.c.0.s8 %v389
    %v391 = vlaneseq
    %v392 = vshrl.u32 %v391, 7
    %v393 = vsub.s32 %v390, %v392
    %v394 = vrot.slane %v387, %v393
    %v395 = vcombine.low %v163, %v170
    %v397 = vunpack.c.l.s4 1983009808
    %v398 = vunpack.c.0.s8 %v397
    %v399 = vlaneseq
    %v400 = vshrl.u32 %v399, 7
    %v401 = vsub.s32 %v398, %v400
    %v402 = vrot.slane %v395, %v401
    %v403 = vcombine.low %v173, %v174
    %v405 = vunpack.c.l.s4 1983009808
    %v406 = vunpack.c.0.s8 %v405
    %v407 = vlaneseq
    %v408 = vshrl.u32 %v407, 7
    %v409 = vsub.s32 %v406, %v408
    %v410 = vrot.slane %v403, %v409
    %v411 = vcombine.low %v386, %v394
    %v412 = vcombine.high %v386, %v394
    %v414 = vunpack.c.l.s4 1934713408
    %v415 = vunpack.c.0.s8 %v414
    %v416 = vlaneseq
    %v417 = vshrl.u32 %v416, 7
    %v418 = vsub.s32 %v415, %v417
    %v419 = vrot.slane %v411, %v418
    %v421 = vunpack.c.l.s4 1934713408
    %v422 = vunpack.c.0.s8 %v421
    %v423 = vlaneseq
    %v424 = vshrl.u32 %v423, 7
    %v425 = vsub.s32 %v422, %v424
    %v426 = vrot.slane %v412, %v425
    %v427 = vcombine.low %v402, %v410
    %v428 = vcombine.high %v402, %v410
    %v430 = vunpack.c.l.s4 1934713408
    %v431 = vunpack.c.0.s8 %v430
    %v432 = vlaneseq
    %v433 = vshrl.u32 %v432, 7
    %v434 = vsub.s32 %v431, %v433
    %v435 = vrot.slane %v427, %v434
    %v437 = vunpack.c.l.s4 1934713408
    %v438 = vunpack.c.0.s8 %v437
    %v439 = vlaneseq
    %v440 = vshrl.u32 %v439, 7
    %v441 = vsub.s32 %v438, %v440
    %v442 = vrot.slane %v428, %v441
    %v443 = vcombine.low %v419, %v435
    %v444 = vcombine.high %v419, %v435
    %v445 = vcombine.low %v426, %v442
    %v446 = vcombine.high %v426, %v442
    %v447 = vcombine.low %v215, %v222
    %v449 = vunpack.c.l.s4 1983009808
    %v450 = vunpack.c.0.s8 %v449
    %v451 = vlaneseq
    %v452 = vshrl.u32 %v451, 7
    %v453 = vsub.s32 %v450, %v452
    %v454 = vrot.slane %v447, %v453
    %v455 = vcombine.low %v239, %v240
    %v457 = vunpack.c.l.s4 1983009808
    %v458 = vunpack.c.0.s8 %v457
    %v459 = vlaneseq
    %v460 = vshrl.u32 %v459, 7
    %v461 = vsub.s32 %v458, %v460
    %v462 = vrot.slane %v455, %v461
    %v463 = vcombine.low %v231, %v238
    %v465 = vunpack.c.l.s4 1983009808
    %v466 = vunpack.c.0.s8 %v465
    %v467 = vlaneseq
    %v468 = vshrl.u32 %v467, 7
    %v469 = vsub.s32 %v466, %v468
    %v470 = vrot.slane %v463, %v469
    %v471 = vcombine.low %v241, %v242
    %v473 = vunpack.c.l.s4 1983009808
    %v474 = vunpack.c.0.s8 %v473
    %v475 = vlaneseq
    %v476 = vshrl.u32 %v475, 7
    %v477 = vsub.s32 %v474, %v476
    %v478 = vrot.slane %v471, %v477
    %v479 = vcombine.low %v454, %v462
    %v480 = vcombine.high %v454, %v462
    %v482 = vunpack.c.l.s4 1934713408
    %v483 = vunpack.c.0.s8 %v482
    %v484 = vlaneseq
    %v485 = vshrl.u32 %v484, 7
    %v486 = vsub.s32 %v483, %v485
    %v487 = vrot.slane %v479, %v486
    %v489 = vunpack.c.l.s4 1934713408
    %v490 = vunpack.c.0.s8 %v489
    %v491 = vlaneseq
    %v492 = vshrl.u32 %v491, 7
    %v493 = vsub.s32 %v490, %v492
    %v494 = vrot.slane %v480, %v493
    %v495 = vcombine.low %v470, %v478
    %v496 = vcombine.high %v470, %v478
    %v498 = vunpack.c.l.s4 1934713408
    %v499 = vunpack.c.0.s8 %v498
    %v500 = vlaneseq
    %v501 = vshrl.u32 %v500, 7
    %v502 = vsub.s32 %v499, %v501
    %v503 = vrot.slane %v495, %v502
    %v505 = vunpack.c.l.s4 1934713408
    %v506 = vunpack.c.0.s8 %v505
    %v507 = vlaneseq
    %v508 = vshrl.u32 %v507, 7
    %v509 = vsub.s32 %v506, %v508
    %v510 = vrot.slane %v496, %v509
    %v511 = vcombine.low %v487, %v503
    %v512 = vcombine.high %v487, %v503
    %v513 = vcombine.low %v494, %v510
    %v514 = vcombine.high %v494, %v510
    %v515 = vcombine.low %v283, %v290
    %v517 = vunpack.c.l.s4 1983009808
    %v518 = vunpack.c.0.s8 %v517
    %v519 = vlaneseq
    %v520 = vshrl.u32 %v519, 7
    %v521 = vsub.s32 %v518, %v520
    %v522 = vrot.slane %v515, %v521
    %v523 = vcombine.low %v307, %v308
    %v525 = vunpack.c.l.s4 1983009808
    %v526 = vunpack.c.0.s8 %v525
    %v527 = vlaneseq
    %v528 = vshrl.u32 %v527, 7
    %v529 = vsub.s32 %v526, %v528
    %v530 = vrot.slane %v523, %v529
    %v531 = vcombine.low %v299, %v306
    %v533 = vunpack.c.l.s4 1983009808
    %v534 = vunpack.c.0.s8 %v533
    %v535 = vlaneseq
    %v536 = vshrl.u32 %v535, 7
    %v537 = vsub.s32 %v534, %v536
    %v538 = vrot.slane %v531, %v537
    %v539 = vcombine.low %v309, %v310
    %v541 = vunpack.c.l.s4 1983009808
    %v542 = vunpack.c.0.s8 %v541
    %v543 = vlaneseq
    %v544 = vshrl.u32 %v543, 7
    %v545 = vsub.s32 %v542, %v544
    %v546 = vrot.slane %v539, %v545
    %v547 = vcombine.low %v522, %v530
    %v548 = vcombine.high %v522, %v530
    %v550 = vunpack.c.l.s4 1934713408
    %v551 = vunpack.c.0.s8 %v550
    %v552 = vlaneseq
    %v553 = vshrl.u32 %v552, 7
    %v554 = vsub.s32 %v551, %v553
    %v555 = vrot.slane %v547, %v554
    %v557 = vunpack.c.l.s4 1934713408
    %v558 = vunpack.c.0.s8 %v557
    %v559 = vlaneseq
    %v560 = vshrl.u32 %v559, 7
    %v561 = vsub.s32 %v558, %v560
    %v562 = vrot.slane %v548, %v561
    %v563 = vcombine.low %v538, %v546
    %v564 = vcombine.high %v538, %v546
    %v566 = vunpack.c.l.s4 1934713408
    %v567 = vunpack.c.0.s8 %v566
    %v568 = vlaneseq
    %v569 = vshrl.u32 %v568, 7
    %v570 = vsub.s32 %v567, %v569
    %v571 = vrot.slane %v563, %v570
    %v573 = vunpack.c.l.s4 1934713408
    %v574 = vunpack.c.0.s8 %v573
    %v575 = vlaneseq
    %v576 = vshrl.u32 %v575, 7
    %v577 = vsub.s32 %v574, %v576
    %v578 = vrot.slane %v564, %v577
    %v579 = vcombine.low %v555, %v571
    %v580 = vcombine.high %v555, %v571
    %v581 = vcombine.low %v562, %v578
    %v582 = vcombine.high %v562, %v578
    %587 = vrot.lane.b32.xlu0 %v376, 16
    %v588 = vpop.permute.xlu0 %587
    %589 = vrot.lane.b32.xlu0 %v444, 16
    %v590 = vpop.permute.xlu0 %589
    %591 = vrot.lane.b32.xlu0 %v512, 16
    %v592 = vpop.permute.xlu0 %591
    %593 = vrot.lane.b32.xlu0 %v580, 16
    %v594 = vpop.permute.xlu0 %593
    %603 = vrot.lane.b32.xlu0 %v377, 32
    %v604 = vpop.permute.xlu0 %603
    %605 = vrot.lane.b32.xlu0 %v445, 32
    %v606 = vpop.permute.xlu0 %605
    %607 = vrot.lane.b32.xlu0 %v513, 32
    %v608 = vpop.permute.xlu0 %607
    %609 = vrot.lane.b32.xlu0 %v581, 32
    %v610 = vpop.permute.xlu0 %609
    %619 = vrot.lane.b32.xlu0 %v378, 48
    %v620 = vpop.permute.xlu0 %619
    %621 = vrot.lane.b32.xlu0 %v446, 48
    %v622 = vpop.permute.xlu0 %621
    %623 = vrot.lane.b32.xlu0 %v514, 48
    %v624 = vpop.permute.xlu0 %623
    %625 = vrot.lane.b32.xlu0 %v582, 48
    %v626 = vpop.permute.xlu0 %625
    %vm631 = vcmask 130048
    %v632 = vsel %vm631, %v375, %v588
    %v633 = vsel %vm631, %v443, %v590
    %v634 = vsel %vm631, %v511, %v592
    %v635 = vsel %vm631, %v579, %v594
    %vm636 = vcmask 261120
    %v637 = vsel %vm636, %v632, %v604
    %v638 = vsel %vm636, %v633, %v606
    %v639 = vsel %vm636, %v634, %v608
    %v640 = vsel %vm636, %v635, %v610
    %vm641 = vcmask 392192
    %v642 = vsel %vm641, %v637, %v620
    %v643 = vsel %vm641, %v638, %v622
    %v644 = vsel %vm641, %v639, %v624
    %v645 = vsel %vm641, %v640, %v626
    %vm646 = vcmask 523264
    %647 = vst.msk [vmem:[#allocation5] sm:$0xff] %vm646, %v642
    %648 = vst.msk [vmem:[#allocation5 + $0x8] sm:$0xff] %vm646, %v643
    %649 = vst.msk [vmem:[#allocation5 + $0x10] sm:$0xff] %vm646, %v644
    %650 = vst.msk [vmem:[#allocation5 + $0x18] sm:$0xff] %vm646, %v645
    // Predicated region
    $region10: #{tpu_custom_call.1} parent=1 // pred_check
      _
    $region11: #{tpu_custom_call.1} parent=1 // pred_check_branch
      %652 = sbr.rel (0) target = $region13
    $region12: #{tpu_custom_call.1} parent=1 // pred_region
      %s654 = ssub.s32 512, 512
      %655 = vsyncadd [#allocation4], %s654
      %s656 = sshll.u32 [#allocation5], 4
      %s657 = int_to_ptr.vmem [resolvable:$true] %s656
      %662 = dma.vmem_to_hbm [thread:$0]  %s657, 512, %s1, [#allocation4], 128, 128, 8
    $region13: #{tpu_custom_call.1} parent=1 // pred_fallthru
      _
    // Predicated region
    $region14: #{tpu_custom_call.1} parent=1 // pred_check
      _
    $region15: #{tpu_custom_call.1} parent=1 // pred_check_branch
      %664 = sbr.rel (0) target = $region17
    $region16: #{tpu_custom_call.1} parent=1 // pred_region
      %665 = dma.done [#allocation4], 512
    $region17: #{tpu_custom_call.1} parent=1 // pred_fallthru
      _
    %666 = vsyncpa [#allocation3], 1
    %667 = vsyncpa [#allocation4], 1

</llo_original>
